<compile_context>
chip_gen: v5e
topology: v5e:2x2
jax: 0.10.0
libtpu: 0.0.40
codegen_flags: <defaults>
</compile_context>

<pallas_src>
import functools

import jax
import jax.numpy as jnp
from jax import lax
from jax.experimental import pallas as pl
from jax.experimental.pallas import tpu as pltpu


def gru_recurrence_kernel(gi_ref, whh_ref, bhn_ref, hs_ref, h_ref):
    """One grid step == TT timesteps of the GRU recurrence for one batch block.

    gi_ref : (TT, BB, 3H) hoisted input-side gate pre-activations (r|z|n),
             with b_ih and the r/z parts of b_hh already folded in.
    whh_ref: (H, 3H)      hidden->gate weights, transposed & gate-fused (resident).
    bhn_ref: (1, H)       hidden bias of the n gate (stays under r*(...)).
    hs_ref : (TT, BB, H)  output hidden states for this block.
    h_ref  : (BB, H)      VMEM scratch hidden state carried across time blocks.
    """
    h_size = whh_ref.shape[0]
    tt = gi_ref.shape[0]

    @pl.when(pl.program_id(1) == 0)           # first time block: h0 = zeros
    def _():
        h_ref[...] = jnp.zeros_like(h_ref)

    # Hoist resident weight / bias loads out of the unrolled time loop.
    w_hh = whh_ref[...]
    b_hn = bhn_ref[...]

    def step(i, h):
        gi = gi_ref[i]                                                  # (BB, 3H)
        gh = jnp.dot(h, w_hh, preferred_element_type=jnp.float32)       # fused 3-gate matmul
        r = jax.nn.sigmoid(gi[:, :h_size] + gh[:, :h_size])
        z = jax.nn.sigmoid(gi[:, h_size:2 * h_size] + gh[:, h_size:2 * h_size])
        n = jnp.tanh(gi[:, 2 * h_size:] + r * (gh[:, 2 * h_size:] + b_hn))
        h_new = (1.0 - z) * n + z * h
        hs_ref[i] = h_new.astype(hs_ref.dtype)
        return h_new

    h_ref[...] = lax.fori_loop(0, tt, step, h_ref[...], unroll=True)


@functools.partial(jax.jit, static_argnames=("tt",))
def gru_deep_forward(x, w_ih_f, w_hh_f, b_gi, b_hn, w_fc_t, b_fc, *, tt=8):
    """x: (B, T, X) batch-first.  Returns (B, T, Y), matching GRUDeepModel.forward.

    Kernel-layout params (see prepare_params):
      w_ih_f (X, 3H), w_hh_f (H, 3H), b_gi (3H,), b_hn (H,), w_fc_t (H, Y), b_fc (Y,)
    """
    B, T, _ = x.shape
    H, G = w_hh_f.shape            # G == 3H
    Y = w_fc_t.shape[1]
    hp = jax.lax.Precision.HIGHEST

    # (1) Hoisted input-side projection for ALL timesteps, emitted time-major
    #     (layout change fused into the dot output; no separate transpose of x).
    gi = jnp.einsum("btx,xg->tbg", x.astype(jnp.float32), w_ih_f,
                    precision=hp, preferred_element_type=jnp.float32)
    gi = gi + b_gi[None, None, :]

    # Pad T up to a multiple of the time block.  Padded steps compute junk that
    # is sliced away; they come after the real timesteps so they cannot pollute.
    t_pad = pl.cdiv(T, tt) * tt
    if t_pad != T:
        gi = jnp.pad(gi, ((0, t_pad - T), (0, 0), (0, 0)))
    nt = t_pad // tt

    # Optional batch-block "parallel" axis (independent batch shards -> lets the
    # two v7x TensorCores each run half the recurrence).  Batch blocks must keep
    # the sublane dim a multiple of 8, so only split when that holds.
    nb = 2 if (B % 16 == 0) else 1
    bb = B // nb

    hs = pl.pallas_call(
        gru_recurrence_kernel,
        out_shape=jax.ShapeDtypeStruct((t_pad, B, H), jnp.float32),
        grid_spec=pltpu.PrefetchScalarGridSpec(
            num_scalar_prefetch=0,
            grid=(nb, nt),                                   # sequential time axis last
            in_specs=[
                pl.BlockSpec((tt, bb, G), lambda b, t: (t, b, 0)),   # gi time block
                pl.BlockSpec((H, G), lambda b, t: (0, 0)),           # w_hh (resident)
                pl.BlockSpec((1, H), lambda b, t: (0, 0)),           # b_hn (resident)
            ],
            out_specs=pl.BlockSpec((tt, bb, H), lambda b, t: (t, b, 0)),
            scratch_shapes=[pltpu.VMEM((bb, H), jnp.float32)],       # carried h state
        ),
        compiler_params=pltpu.CompilerParams(
            dimension_semantics=("parallel", "arbitrary")),
    )(gi, w_hh_f, b_hn.reshape(1, H))

    hs = hs[:T]                                              # (T, B, H)

    # (4) Linear head as one big matmul; batch-first output layout folded in.
    out = jnp.einsum("tbh,hy->bty", hs, w_fc_t,
                     precision=hp, preferred_element_type=jnp.float32)
    return out + b_fc[None, None, :]


# ----------------------------------------------------------------------------
# Parameter handling (torch layout <-> kernel layout) and pure-JAX reference.
# ----------------------------------------------------------------------------

def init_torch_params(key, x_size, width, y_size):
    """Random params in torch layout: weight_ih_l0 (3H,X), weight_hh_l0 (3H,H),
    bias_ih_l0 (3H,), bias_hh_l0 (3H,), fc.weight (Y,H), fc.bias (Y,)."""
    ks = jax.random.split(key, 6)
    s = 1.0 / jnp.sqrt(jnp.float32(width))
    w_ih = jax.random.uniform(ks[0], (3 * width, x_size), jnp.float32, -s, s)
    w_hh = jax.random.uniform(ks[1], (3 * width, width), jnp.float32, -s, s)
    b_ih = jax.random.uniform(ks[2], (3 * width,), jnp.float32, -s, s)
    b_hh = jax.random.uniform(ks[3], (3 * width,), jnp.float32, -s, s)
    w_fc = jax.random.uniform(ks[4], (y_size, width), jnp.float32, -s, s)
    b_fc = jax.random.uniform(ks[5], (y_size,), jnp.float32, -s, s)
    return w_ih, w_hh, b_ih, b_hh, w_fc, b_fc


def prepare_params(w_ih, w_hh, b_ih, b_hh, w_fc, b_fc):
    """torch layout -> kernel layout (transposed, gate-fused, r/z biases folded)."""
    H = w_hh.shape[1]
    w_ih_f = w_ih.T                                   # (X, 3H), gate cols [r|z|n]
    w_hh_f = w_hh.T                                   # (H, 3H)
    b_gi = b_ih.at[: 2 * H].add(b_hh[: 2 * H])        # fold b_hr, b_hz into gi bias
    b_hn = b_hh[2 * H:]                               # must stay inside r*(...)
    return w_ih_f, w_hh_f, b_gi, b_hn, w_fc.T, b_fc


def ref_gru_deep(x, w_ih, w_hh, b_ih, b_hh, w_fc, b_fc):
    """Pure-JAX reference of torch.nn.GRU(batch_first) + nn.Linear (torch layout)."""
    B, _, _ = x.shape
    H = w_hh.shape[1]
    hp = jax.lax.Precision.HIGHEST

    def step(h, x_t):
        gi = jnp.einsum("bx,gx->bg", x_t, w_ih, precision=hp) + b_ih
        gh = jnp.einsum("bh,gh->bg", h, w_hh, precision=hp) + b_hh
        r = jax.nn.sigmoid(gi[:, :H] + gh[:, :H])
        z = jax.nn.sigmoid(gi[:, H:2 * H] + gh[:, H:2 * H])
        n = jnp.tanh(gi[:, 2 * H:] + r * gh[:, 2 * H:])
        h_new = (1.0 - z) * n + z * h
        return h_new, h_new

    h0 = jnp.zeros((B, H), jnp.float32)
    _, hs = lax.scan(step, h0, jnp.swapaxes(x, 0, 1))         # (T, B, H)
    return jnp.einsum("tbh,yh->bty", hs, w_fc, precision=hp) + b_fc


if __name__ == "__main__":
    # GRUDeepModel(width=32, x_size=16, y_size=4)
    x_size, width, y_size = 16, 32, 4

    key = jax.random.PRNGKey(0)
    k_small, k_big, kp = jax.random.split(key, 3)
    torch_params = init_torch_params(kp, x_size, width, y_size)
    kernel_params = prepare_params(*torch_params)

    cases = (
        ("small", k_small, 2, 8),    # single batch block, T == TT
        ("large", k_big, 16, 12),    # exercises batch-parallel axis + T padding
    )
    for name, kx, batch, seq in cases:
        x = jax.random.normal(kx, (batch, seq, x_size), jnp.float32)
        out = jax.block_until_ready(gru_deep_forward(x, *kernel_params))
        ref = ref_gru_deep(x, *torch_params)
        assert out.shape == (batch, seq, y_size)
        assert jnp.allclose(out, ref, atol=1e-4, rtol=1e-4), f"Pallas GRU mismatch ({name})"

    print("KERNEL_OK")
</pallas_src>

<mosaic_0001>
module attributes {stable_mosaic.version = 11 : i64} {
  func.func @gru_recurrence_kernel(%arg0: i32, %arg1: i32, %arg2: memref<8x2x96xf32, #tpu.memory_space<vmem>>, %arg3: memref<32x96xf32, #tpu.memory_space<vmem>>, %arg4: memref<1x32xf32, #tpu.memory_space<vmem>>, %arg5: memref<8x2x32xf32, #tpu.memory_space<vmem>>, %arg6: memref<2x32xf32, #tpu.memory_space<vmem>>) attributes {dimension_semantics = [#tpu.dimension_semantics<parallel>, #tpu.dimension_semantics<arbitrary>], iteration_bounds = array<i64: 1, 1>, scalar_prefetch = 0 : i64, scratch_operands = 1 : i64, tpu.core_type = #tpu.core_type<tc>, window_params = [{transform_indices = @transform_0, window_bounds = array<i64: 8, 2, 96>}, {pipeline_mode = #tpu.pipeline_mode<synchronous>, transform_indices = @transform_1, window_bounds = array<i64: 32, 96>}, {pipeline_mode = #tpu.pipeline_mode<synchronous>, transform_indices = @transform_2, window_bounds = array<i64: 1, 32>}, {transform_indices = @transform_3, window_bounds = array<i64: 8, 2, 32>}]} {
    %c0_i32 = arith.constant 0 : i32
    %0 = arith.cmpi eq, %arg1, %c0_i32 : i32
    %1 = arith.extui %0 : i1 to i32
    %c0_i32_0 = arith.constant 0 : i32
    %2 = arith.cmpi ne, %1, %c0_i32_0 : i32
    scf.if %2 {
      %cst_72 = arith.constant 0.000000e+00 : f32
      %295 = vector.broadcast %cst_72 : f32 to vector<2x32xf32>
      %c0_73 = arith.constant 0 : index
      %c0_74 = arith.constant 0 : index
      %296 = vector.load %arg6[%c0_73, %c0_74] : memref<2x32xf32, #tpu.memory_space<vmem>>, vector<2x32xf32>
      tpu.vector_store %arg6[%c0_73, %c0_74], %295 {strides = array<i32>} : memref<2x32xf32, #tpu.memory_space<vmem>>, vector<2x32xf32>,
    } else {
    }
    %c0 = arith.constant 0 : index
    %c0_1 = arith.constant 0 : index
    %3 = vector.load %arg3[%c0, %c0_1] : memref<32x96xf32, #tpu.memory_space<vmem>>, vector<32x96xf32>
    %c0_2 = arith.constant 0 : index
    %c0_3 = arith.constant 0 : index
    %4 = vector.load %arg4[%c0_2, %c0_3] : memref<1x32xf32, #tpu.memory_space<vmem>>, vector<1x32xf32>
    %c0_4 = arith.constant 0 : index
    %c0_5 = arith.constant 0 : index
    %5 = vector.load %arg6[%c0_4, %c0_5] : memref<2x32xf32, #tpu.memory_space<vmem>>, vector<2x32xf32>
    %c0_i32_6 = arith.constant 0 : i32
    %6 = arith.index_cast %c0_i32_6 : i32 to index
    %c0_7 = arith.constant 0 : index
    %c0_8 = arith.constant 0 : index
    %7 = vector.load %arg2[%6, %c0_7, %c0_8] : memref<8x2x96xf32, #tpu.memory_space<vmem>>, vector<1x2x96xf32>
    %8 = vector.shape_cast %7 : vector<1x2x96xf32> to vector<2x96xf32>
    %cst = arith.constant dense<0.000000e+00> : vector<2x96xf32>
    %9 = tpu.matmul %5, %3, %cst {dimension_numbers = #tpu.dot_dimension_numbers<[1], [0], [0], [1], [0, 0, 1, 1], [], []>} : vector<2x32xf32>, vector<32x96xf32>, vector<2x96xf32> -> vector<2x96xf32>
    %10 = vector.extract_strided_slice %8 {offsets = [0, 0], sizes = [2, 32], strides = [1, 1]} : vector<2x96xf32> to vector<2x32xf32>
    %11 = vector.extract_strided_slice %9 {offsets = [0, 0], sizes = [2, 32], strides = [1, 1]} : vector<2x96xf32> to vector<2x32xf32>
    %12 = arith.addf %10, %11 : vector<2x32xf32>
    %13 = arith.negf %12 : vector<2x32xf32>
    %14 = math.exp %13 : vector<2x32xf32>
    %cst_9 = arith.constant 1.000000e+00 : f32
    %15 = vector.broadcast %cst_9 : f32 to vector<2x32xf32>
    %16 = arith.addf %15, %14 : vector<2x32xf32>
    %17 = arith.divf %15, %16 : vector<2x32xf32>
    %18 = vector.extract_strided_slice %8 {offsets = [0, 32], sizes = [2, 32], strides = [1, 1]} : vector<2x96xf32> to vector<2x32xf32>
    %19 = vector.extract_strided_slice %9 {offsets = [0, 32], sizes = [2, 32], strides = [1, 1]} : vector<2x96xf32> to vector<2x32xf32>
    %20 = arith.addf %18, %19 : vector<2x32xf32>
    %21 = arith.negf %20 : vector<2x32xf32>
    %22 = math.exp %21 : vector<2x32xf32>
    %cst_10 = arith.constant 1.000000e+00 : f32
    %23 = vector.broadcast %cst_10 : f32 to vector<2x32xf32>
    %24 = arith.addf %23, %22 : vector<2x32xf32>
    %25 = arith.divf %23, %24 : vector<2x32xf32>
    %26 = vector.extract_strided_slice %8 {offsets = [0, 64], sizes = [2, 32], strides = [1, 1]} : vector<2x96xf32> to vector<2x32xf32>
    %27 = vector.extract_strided_slice %9 {offsets = [0, 64], sizes = [2, 32], strides = [1, 1]} : vector<2x96xf32> to vector<2x32xf32>
    %28 = vector.broadcast %4 : vector<1x32xf32> to vector<2x32xf32>
    %29 = arith.addf %27, %28 : vector<2x32xf32>
    %30 = arith.mulf %17, %29 : vector<2x32xf32>
    %31 = arith.addf %26, %30 : vector<2x32xf32>
    %32 = math.tanh %31 : vector<2x32xf32>
    %cst_11 = arith.constant 1.000000e+00 : f32
    %33 = vector.broadcast %cst_11 : f32 to vector<2x32xf32>
    %34 = arith.subf %33, %25 : vector<2x32xf32>
    %35 = arith.mulf %34, %32 : vector<2x32xf32>
    %36 = arith.mulf %25, %5 : vector<2x32xf32>
    %37 = arith.addf %35, %36 : vector<2x32xf32>
    %38 = arith.index_cast %c0_i32_6 : i32 to index
    %c0_12 = arith.constant 0 : index
    %c0_13 = arith.constant 0 : index
    %39 = vector.load %arg5[%38, %c0_12, %c0_13] : memref<8x2x32xf32, #tpu.memory_space<vmem>>, vector<1x2x32xf32>
    %40 = vector.shape_cast %39 : vector<1x2x32xf32> to vector<2x32xf32>
    %41 = vector.shape_cast %37 : vector<2x32xf32> to vector<1x2x32xf32>
    tpu.vector_store %arg5[%38, %c0_12, %c0_13], %41 {strides = array<i32>} : memref<8x2x32xf32, #tpu.memory_space<vmem>>, vector<1x2x32xf32>,
    %c1_i32 = arith.constant 1 : i32
    %42 = arith.index_cast %c1_i32 : i32 to index
    %c0_14 = arith.constant 0 : index
    %c0_15 = arith.constant 0 : index
    %43 = vector.load %arg2[%42, %c0_14, %c0_15] : memref<8x2x96xf32, #tpu.memory_space<vmem>>, vector<1x2x96xf32>
    %44 = vector.shape_cast %43 : vector<1x2x96xf32> to vector<2x96xf32>
    %cst_16 = arith.constant dense<0.000000e+00> : vector<2x96xf32>
    %45 = tpu.matmul %37, %3, %cst_16 {dimension_numbers = #tpu.dot_dimension_numbers<[1], [0], [0], [1], [0, 0, 1, 1], [], []>} : vector<2x32xf32>, vector<32x96xf32>, vector<2x96xf32> -> vector<2x96xf32>
    %46 = vector.extract_strided_slice %44 {offsets = [0, 0], sizes = [2, 32], strides = [1, 1]} : vector<2x96xf32> to vector<2x32xf32>
    %47 = vector.extract_strided_slice %45 {offsets = [0, 0], sizes = [2, 32], strides = [1, 1]} : vector<2x96xf32> to vector<2x32xf32>
    %48 = arith.addf %46, %47 : vector<2x32xf32>
    %49 = arith.negf %48 : vector<2x32xf32>
    %50 = math.exp %49 : vector<2x32xf32>
    %cst_17 = arith.constant 1.000000e+00 : f32
    %51 = vector.broadcast %cst_17 : f32 to vector<2x32xf32>
    %52 = arith.addf %51, %50 : vector<2x32xf32>
    %53 = arith.divf %51, %52 : vector<2x32xf32>
    %54 = vector.extract_strided_slice %44 {offsets = [0, 32], sizes = [2, 32], strides = [1, 1]} : vector<2x96xf32> to vector<2x32xf32>
    %55 = vector.extract_strided_slice %45 {offsets = [0, 32], sizes = [2, 32], strides = [1, 1]} : vector<2x96xf32> to vector<2x32xf32>
    %56 = arith.addf %54, %55 : vector<2x32xf32>
    %57 = arith.negf %56 : vector<2x32xf32>
    %58 = math.exp %57 : vector<2x32xf32>
    %cst_18 = arith.constant 1.000000e+00 : f32
    %59 = vector.broadcast %cst_18 : f32 to vector<2x32xf32>
    %60 = arith.addf %59, %58 : vector<2x32xf32>
    %61 = arith.divf %59, %60 : vector<2x32xf32>
    %62 = vector.extract_strided_slice %44 {offsets = [0, 64], sizes = [2, 32], strides = [1, 1]} : vector<2x96xf32> to vector<2x32xf32>
    %63 = vector.extract_strided_slice %45 {offsets = [0, 64], sizes = [2, 32], strides = [1, 1]} : vector<2x96xf32> to vector<2x32xf32>
    %64 = vector.broadcast %4 : vector<1x32xf32> to vector<2x32xf32>
    %65 = arith.addf %63, %64 : vector<2x32xf32>
    %66 = arith.mulf %53, %65 : vector<2x32xf32>
    %67 = arith.addf %62, %66 : vector<2x32xf32>
    %68 = math.tanh %67 : vector<2x32xf32>
    %cst_19 = arith.constant 1.000000e+00 : f32
    %69 = vector.broadcast %cst_19 : f32 to vector<2x32xf32>
    %70 = arith.subf %69, %61 : vector<2x32xf32>
    %71 = arith.mulf %70, %68 : vector<2x32xf32>
    %72 = arith.mulf %61, %37 : vector<2x32xf32>
    %73 = arith.addf %71, %72 : vector<2x32xf32>
    %74 = arith.index_cast %c1_i32 : i32 to index
    %c0_20 = arith.constant 0 : index
    %c0_21 = arith.constant 0 : index
    %75 = vector.load %arg5[%74, %c0_20, %c0_21] : memref<8x2x32xf32, #tpu.memory_space<vmem>>, vector<1x2x32xf32>
    %76 = vector.shape_cast %75 : vector<1x2x32xf32> to vector<2x32xf32>
    %77 = vector.shape_cast %73 : vector<2x32xf32> to vector<1x2x32xf32>
    tpu.vector_store %arg5[%74, %c0_20, %c0_21], %77 {strides = array<i32>} : memref<8x2x32xf32, #tpu.memory_space<vmem>>, vector<1x2x32xf32>,
    %c2_i32 = arith.constant 2 : i32
    %78 = arith.index_cast %c2_i32 : i32 to index
    %c0_22 = arith.constant 0 : index
    %c0_23 = arith.constant 0 : index
    %79 = vector.load %arg2[%78, %c0_22, %c0_23] : memref<8x2x96xf32, #tpu.memory_space<vmem>>, vector<1x2x96xf32>
    %80 = vector.shape_cast %79 : vector<1x2x96xf32> to vector<2x96xf32>
    %cst_24 = arith.constant dense<0.000000e+00> : vector<2x96xf32>
    %81 = tpu.matmul %73, %3, %cst_24 {dimension_numbers = #tpu.dot_dimension_numbers<[1], [0], [0], [1], [0, 0, 1, 1], [], []>} : vector<2x32xf32>, vector<32x96xf32>, vector<2x96xf32> -> vector<2x96xf32>
    %82 = vector.extract_strided_slice %80 {offsets = [0, 0], sizes = [2, 32], strides = [1, 1]} : vector<2x96xf32> to vector<2x32xf32>
    %83 = vector.extract_strided_slice %81 {offsets = [0, 0], sizes = [2, 32], strides = [1, 1]} : vector<2x96xf32> to vector<2x32xf32>
    %84 = arith.addf %82, %83 : vector<2x32xf32>
    %85 = arith.negf %84 : vector<2x32xf32>
    %86 = math.exp %85 : vector<2x32xf32>
    %cst_25 = arith.constant 1.000000e+00 : f32
    %87 = vector.broadcast %cst_25 : f32 to vector<2x32xf32>
    %88 = arith.addf %87, %86 : vector<2x32xf32>
    %89 = arith.divf %87, %88 : vector<2x32xf32>
    %90 = vector.extract_strided_slice %80 {offsets = [0, 32], sizes = [2, 32], strides = [1, 1]} : vector<2x96xf32> to vector<2x32xf32>
    %91 = vector.extract_strided_slice %81 {offsets = [0, 32], sizes = [2, 32], strides = [1, 1]} : vector<2x96xf32> to vector<2x32xf32>
    %92 = arith.addf %90, %91 : vector<2x32xf32>
    %93 = arith.negf %92 : vector<2x32xf32>
    %94 = math.exp %93 : vector<2x32xf32>
    %cst_26 = arith.constant 1.000000e+00 : f32
    %95 = vector.broadcast %cst_26 : f32 to vector<2x32xf32>
    %96 = arith.addf %95, %94 : vector<2x32xf32>
    %97 = arith.divf %95, %96 : vector<2x32xf32>
    %98 = vector.extract_strided_slice %80 {offsets = [0, 64], sizes = [2, 32], strides = [1, 1]} : vector<2x96xf32> to vector<2x32xf32>
    %99 = vector.extract_strided_slice %81 {offsets = [0, 64], sizes = [2, 32], strides = [1, 1]} : vector<2x96xf32> to vector<2x32xf32>
    %100 = vector.broadcast %4 : vector<1x32xf32> to vector<2x32xf32>
    %101 = arith.addf %99, %100 : vector<2x32xf32>
    %102 = arith.mulf %89, %101 : vector<2x32xf32>
    %103 = arith.addf %98, %102 : vector<2x32xf32>
    %104 = math.tanh %103 : vector<2x32xf32>
    %cst_27 = arith.constant 1.000000e+00 : f32
    %105 = vector.broadcast %cst_27 : f32 to vector<2x32xf32>
    %106 = arith.subf %105, %97 : vector<2x32xf32>
    %107 = arith.mulf %106, %104 : vector<2x32xf32>
    %108 = arith.mulf %97, %73 : vector<2x32xf32>
    %109 = arith.addf %107, %108 : vector<2x32xf32>
    %110 = arith.index_cast %c2_i32 : i32 to index
    %c0_28 = arith.constant 0 : index
    %c0_29 = arith.constant 0 : index
    %111 = vector.load %arg5[%110, %c0_28, %c0_29] : memref<8x2x32xf32, #tpu.memory_space<vmem>>, vector<1x2x32xf32>
    %112 = vector.shape_cast %111 : vector<1x2x32xf32> to vector<2x32xf32>
    %113 = vector.shape_cast %109 : vector<2x32xf32> to vector<1x2x32xf32>
    tpu.vector_store %arg5[%110, %c0_28, %c0_29], %113 {strides = array<i32>} : memref<8x2x32xf32, #tpu.memory_space<vmem>>, vector<1x2x32xf32>,
    %c3_i32 = arith.constant 3 : i32
    %114 = arith.index_cast %c3_i32 : i32 to index
    %c0_30 = arith.constant 0 : index
    %c0_31 = arith.constant 0 : index
    %115 = vector.load %arg2[%114, %c0_30, %c0_31] : memref<8x2x96xf32, #tpu.memory_space<vmem>>, vector<1x2x96xf32>
    %116 = vector.shape_cast %115 : vector<1x2x96xf32> to vector<2x96xf32>
    %cst_32 = arith.constant dense<0.000000e+00> : vector<2x96xf32>
    %117 = tpu.matmul %109, %3, %cst_32 {dimension_numbers = #tpu.dot_dimension_numbers<[1], [0], [0], [1], [0, 0, 1, 1], [], []>} : vector<2x32xf32>, vector<32x96xf32>, vector<2x96xf32> -> vector<2x96xf32>
    %118 = vector.extract_strided_slice %116 {offsets = [0, 0], sizes = [2, 32], strides = [1, 1]} : vector<2x96xf32> to vector<2x32xf32>
    %119 = vector.extract_strided_slice %117 {offsets = [0, 0], sizes = [2, 32], strides = [1, 1]} : vector<2x96xf32> to vector<2x32xf32>
    %120 = arith.addf %118, %119 : vector<2x32xf32>
    %121 = arith.negf %120 : vector<2x32xf32>
    %122 = math.exp %121 : vector<2x32xf32>
    %cst_33 = arith.constant 1.000000e+00 : f32
    %123 = vector.broadcast %cst_33 : f32 to vector<2x32xf32>
    %124 = arith.addf %123, %122 : vector<2x32xf32>
    %125 = arith.divf %123, %124 : vector<2x32xf32>
    %126 = vector.extract_strided_slice %116 {offsets = [0, 32], sizes = [2, 32], strides = [1, 1]} : vector<2x96xf32> to vector<2x32xf32>
    %127 = vector.extract_strided_slice %117 {offsets = [0, 32], sizes = [2, 32], strides = [1, 1]} : vector<2x96xf32> to vector<2x32xf32>
    %128 = arith.addf %126, %127 : vector<2x32xf32>
    %129 = arith.negf %128 : vector<2x32xf32>
    %130 = math.exp %129 : vector<2x32xf32>
    %cst_34 = arith.constant 1.000000e+00 : f32
    %131 = vector.broadcast %cst_34 : f32 to vector<2x32xf32>
    %132 = arith.addf %131, %130 : vector<2x32xf32>
    %133 = arith.divf %131, %132 : vector<2x32xf32>
    %134 = vector.extract_strided_slice %116 {offsets = [0, 64], sizes = [2, 32], strides = [1, 1]} : vector<2x96xf32> to vector<2x32xf32>
    %135 = vector.extract_strided_slice %117 {offsets = [0, 64], sizes = [2, 32], strides = [1, 1]} : vector<2x96xf32> to vector<2x32xf32>
    %136 = vector.broadcast %4 : vector<1x32xf32> to vector<2x32xf32>
    %137 = arith.addf %135, %136 : vector<2x32xf32>
    %138 = arith.mulf %125, %137 : vector<2x32xf32>
    %139 = arith.addf %134, %138 : vector<2x32xf32>
    %140 = math.tanh %139 : vector<2x32xf32>
    %cst_35 = arith.constant 1.000000e+00 : f32
    %141 = vector.broadcast %cst_35 : f32 to vector<2x32xf32>
    %142 = arith.subf %141, %133 : vector<2x32xf32>
    %143 = arith.mulf %142, %140 : vector<2x32xf32>
    %144 = arith.mulf %133, %109 : vector<2x32xf32>
    %145 = arith.addf %143, %144 : vector<2x32xf32>
    %146 = arith.index_cast %c3_i32 : i32 to index
    %c0_36 = arith.constant 0 : index
    %c0_37 = arith.constant 0 : index
    %147 = vector.load %arg5[%146, %c0_36, %c0_37] : memref<8x2x32xf32, #tpu.memory_space<vmem>>, vector<1x2x32xf32>
    %148 = vector.shape_cast %147 : vector<1x2x32xf32> to vector<2x32xf32>
    %149 = vector.shape_cast %145 : vector<2x32xf32> to vector<1x2x32xf32>
    tpu.vector_store %arg5[%146, %c0_36, %c0_37], %149 {strides = array<i32>} : memref<8x2x32xf32, #tpu.memory_space<vmem>>, vector<1x2x32xf32>,
    %c4_i32 = arith.constant 4 : i32
    %150 = arith.index_cast %c4_i32 : i32 to index
    %c0_38 = arith.constant 0 : index
    %c0_39 = arith.constant 0 : index
    %151 = vector.load %arg2[%150, %c0_38, %c0_39] : memref<8x2x96xf32, #tpu.memory_space<vmem>>, vector<1x2x96xf32>
    %152 = vector.shape_cast %151 : vector<1x2x96xf32> to vector<2x96xf32>
    %cst_40 = arith.constant dense<0.000000e+00> : vector<2x96xf32>
    %153 = tpu.matmul %145, %3, %cst_40 {dimension_numbers = #tpu.dot_dimension_numbers<[1], [0], [0], [1], [0, 0, 1, 1], [], []>} : vector<2x32xf32>, vector<32x96xf32>, vector<2x96xf32> -> vector<2x96xf32>
    %154 = vector.extract_strided_slice %152 {offsets = [0, 0], sizes = [2, 32], strides = [1, 1]} : vector<2x96xf32> to vector<2x32xf32>
    %155 = vector.extract_strided_slice %153 {offsets = [0, 0], sizes = [2, 32], strides = [1, 1]} : vector<2x96xf32> to vector<2x32xf32>
    %156 = arith.addf %154, %155 : vector<2x32xf32>
    %157 = arith.negf %156 : vector<2x32xf32>
    %158 = math.exp %157 : vector<2x32xf32>
    %cst_41 = arith.constant 1.000000e+00 : f32
    %159 = vector.broadcast %cst_41 : f32 to vector<2x32xf32>
    %160 = arith.addf %159, %158 : vector<2x32xf32>
    %161 = arith.divf %159, %160 : vector<2x32xf32>
    %162 = vector.extract_strided_slice %152 {offsets = [0, 32], sizes = [2, 32], strides = [1, 1]} : vector<2x96xf32> to vector<2x32xf32>
    %163 = vector.extract_strided_slice %153 {offsets = [0, 32], sizes = [2, 32], strides = [1, 1]} : vector<2x96xf32> to vector<2x32xf32>
    %164 = arith.addf %162, %163 : vector<2x32xf32>
    %165 = arith.negf %164 : vector<2x32xf32>
    %166 = math.exp %165 : vector<2x32xf32>
    %cst_42 = arith.constant 1.000000e+00 : f32
    %167 = vector.broadcast %cst_42 : f32 to vector<2x32xf32>
    %168 = arith.addf %167, %166 : vector<2x32xf32>
    %169 = arith.divf %167, %168 : vector<2x32xf32>
    %170 = vector.extract_strided_slice %152 {offsets = [0, 64], sizes = [2, 32], strides = [1, 1]} : vector<2x96xf32> to vector<2x32xf32>
    %171 = vector.extract_strided_slice %153 {offsets = [0, 64], sizes = [2, 32], strides = [1, 1]} : vector<2x96xf32> to vector<2x32xf32>
    %172 = vector.broadcast %4 : vector<1x32xf32> to vector<2x32xf32>
    %173 = arith.addf %171, %172 : vector<2x32xf32>
    %174 = arith.mulf %161, %173 : vector<2x32xf32>
    %175 = arith.addf %170, %174 : vector<2x32xf32>
    %176 = math.tanh %175 : vector<2x32xf32>
    %cst_43 = arith.constant 1.000000e+00 : f32
    %177 = vector.broadcast %cst_43 : f32 to vector<2x32xf32>
    %178 = arith.subf %177, %169 : vector<2x32xf32>
    %179 = arith.mulf %178, %176 : vector<2x32xf32>
    %180 = arith.mulf %169, %145 : vector<2x32xf32>
    %181 = arith.addf %179, %180 : vector<2x32xf32>
    %182 = arith.index_cast %c4_i32 : i32 to index
    %c0_44 = arith.constant 0 : index
    %c0_45 = arith.constant 0 : index
    %183 = vector.load %arg5[%182, %c0_44, %c0_45] : memref<8x2x32xf32, #tpu.memory_space<vmem>>, vector<1x2x32xf32>
    %184 = vector.shape_cast %183 : vector<1x2x32xf32> to vector<2x32xf32>
    %185 = vector.shape_cast %181 : vector<2x32xf32> to vector<1x2x32xf32>
    tpu.vector_store %arg5[%182, %c0_44, %c0_45], %185 {strides = array<i32>} : memref<8x2x32xf32, #tpu.memory_space<vmem>>, vector<1x2x32xf32>,
    %c5_i32 = arith.constant 5 : i32
    %186 = arith.index_cast %c5_i32 : i32 to index
    %c0_46 = arith.constant 0 : index
    %c0_47 = arith.constant 0 : index
    %187 = vector.load %arg2[%186, %c0_46, %c0_47] : memref<8x2x96xf32, #tpu.memory_space<vmem>>, vector<1x2x96xf32>
    %188 = vector.shape_cast %187 : vector<1x2x96xf32> to vector<2x96xf32>
    %cst_48 = arith.constant dense<0.000000e+00> : vector<2x96xf32>
    %189 = tpu.matmul %181, %3, %cst_48 {dimension_numbers = #tpu.dot_dimension_numbers<[1], [0], [0], [1], [0, 0, 1, 1], [], []>} : vector<2x32xf32>, vector<32x96xf32>, vector<2x96xf32> -> vector<2x96xf32>
    %190 = vector.extract_strided_slice %188 {offsets = [0, 0], sizes = [2, 32], strides = [1, 1]} : vector<2x96xf32> to vector<2x32xf32>
    %191 = vector.extract_strided_slice %189 {offsets = [0, 0], sizes = [2, 32], strides = [1, 1]} : vector<2x96xf32> to vector<2x32xf32>
    %192 = arith.addf %190, %191 : vector<2x32xf32>
    %193 = arith.negf %192 : vector<2x32xf32>
    %194 = math.exp %193 : vector<2x32xf32>
    %cst_49 = arith.constant 1.000000e+00 : f32
    %195 = vector.broadcast %cst_49 : f32 to vector<2x32xf32>
    %196 = arith.addf %195, %194 : vector<2x32xf32>
    %197 = arith.divf %195, %196 : vector<2x32xf32>
    %198 = vector.extract_strided_slice %188 {offsets = [0, 32], sizes = [2, 32], strides = [1, 1]} : vector<2x96xf32> to vector<2x32xf32>
    %199 = vector.extract_strided_slice %189 {offsets = [0, 32], sizes = [2, 32], strides = [1, 1]} : vector<2x96xf32> to vector<2x32xf32>
    %200 = arith.addf %198, %199 : vector<2x32xf32>
    %201 = arith.negf %200 : vector<2x32xf32>
    %202 = math.exp %201 : vector<2x32xf32>
    %cst_50 = arith.constant 1.000000e+00 : f32
    %203 = vector.broadcast %cst_50 : f32 to vector<2x32xf32>
    %204 = arith.addf %203, %202 : vector<2x32xf32>
    %205 = arith.divf %203, %204 : vector<2x32xf32>
    %206 = vector.extract_strided_slice %188 {offsets = [0, 64], sizes = [2, 32], strides = [1, 1]} : vector<2x96xf32> to vector<2x32xf32>
    %207 = vector.extract_strided_slice %189 {offsets = [0, 64], sizes = [2, 32], strides = [1, 1]} : vector<2x96xf32> to vector<2x32xf32>
    %208 = vector.broadcast %4 : vector<1x32xf32> to vector<2x32xf32>
    %209 = arith.addf %207, %208 : vector<2x32xf32>
    %210 = arith.mulf %197, %209 : vector<2x32xf32>
    %211 = arith.addf %206, %210 : vector<2x32xf32>
    %212 = math.tanh %211 : vector<2x32xf32>
    %cst_51 = arith.constant 1.000000e+00 : f32
    %213 = vector.broadcast %cst_51 : f32 to vector<2x32xf32>
    %214 = arith.subf %213, %205 : vector<2x32xf32>
    %215 = arith.mulf %214, %212 : vector<2x32xf32>
    %216 = arith.mulf %205, %181 : vector<2x32xf32>
    %217 = arith.addf %215, %216 : vector<2x32xf32>
    %218 = arith.index_cast %c5_i32 : i32 to index
    %c0_52 = arith.constant 0 : index
    %c0_53 = arith.constant 0 : index
    %219 = vector.load %arg5[%218, %c0_52, %c0_53] : memref<8x2x32xf32, #tpu.memory_space<vmem>>, vector<1x2x32xf32>
    %220 = vector.shape_cast %219 : vector<1x2x32xf32> to vector<2x32xf32>
    %221 = vector.shape_cast %217 : vector<2x32xf32> to vector<1x2x32xf32>
    tpu.vector_store %arg5[%218, %c0_52, %c0_53], %221 {strides = array<i32>} : memref<8x2x32xf32, #tpu.memory_space<vmem>>, vector<1x2x32xf32>,
    %c6_i32 = arith.constant 6 : i32
    %222 = arith.index_cast %c6_i32 : i32 to index
    %c0_54 = arith.constant 0 : index
    %c0_55 = arith.constant 0 : index
    %223 = vector.load %arg2[%222, %c0_54, %c0_55] : memref<8x2x96xf32, #tpu.memory_space<vmem>>, vector<1x2x96xf32>
    %224 = vector.shape_cast %223 : vector<1x2x96xf32> to vector<2x96xf32>
    %cst_56 = arith.constant dense<0.000000e+00> : vector<2x96xf32>
    %225 = tpu.matmul %217, %3, %cst_56 {dimension_numbers = #tpu.dot_dimension_numbers<[1], [0], [0], [1], [0, 0, 1, 1], [], []>} : vector<2x32xf32>, vector<32x96xf32>, vector<2x96xf32> -> vector<2x96xf32>
    %226 = vector.extract_strided_slice %224 {offsets = [0, 0], sizes = [2, 32], strides = [1, 1]} : vector<2x96xf32> to vector<2x32xf32>
    %227 = vector.extract_strided_slice %225 {offsets = [0, 0], sizes = [2, 32], strides = [1, 1]} : vector<2x96xf32> to vector<2x32xf32>
    %228 = arith.addf %226, %227 : vector<2x32xf32>
    %229 = arith.negf %228 : vector<2x32xf32>
    %230 = math.exp %229 : vector<2x32xf32>
    %cst_57 = arith.constant 1.000000e+00 : f32
    %231 = vector.broadcast %cst_57 : f32 to vector<2x32xf32>
    %232 = arith.addf %231, %230 : vector<2x32xf32>
    %233 = arith.divf %231, %232 : vector<2x32xf32>
    %234 = vector.extract_strided_slice %224 {offsets = [0, 32], sizes = [2, 32], strides = [1, 1]} : vector<2x96xf32> to vector<2x32xf32>
    %235 = vector.extract_strided_slice %225 {offsets = [0, 32], sizes = [2, 32], strides = [1, 1]} : vector<2x96xf32> to vector<2x32xf32>
    %236 = arith.addf %234, %235 : vector<2x32xf32>
    %237 = arith.negf %236 : vector<2x32xf32>
    %238 = math.exp %237 : vector<2x32xf32>
    %cst_58 = arith.constant 1.000000e+00 : f32
    %239 = vector.broadcast %cst_58 : f32 to vector<2x32xf32>
    %240 = arith.addf %239, %238 : vector<2x32xf32>
    %241 = arith.divf %239, %240 : vector<2x32xf32>
    %242 = vector.extract_strided_slice %224 {offsets = [0, 64], sizes = [2, 32], strides = [1, 1]} : vector<2x96xf32> to vector<2x32xf32>
    %243 = vector.extract_strided_slice %225 {offsets = [0, 64], sizes = [2, 32], strides = [1, 1]} : vector<2x96xf32> to vector<2x32xf32>
    %244 = vector.broadcast %4 : vector<1x32xf32> to vector<2x32xf32>
    %245 = arith.addf %243, %244 : vector<2x32xf32>
    %246 = arith.mulf %233, %245 : vector<2x32xf32>
    %247 = arith.addf %242, %246 : vector<2x32xf32>
    %248 = math.tanh %247 : vector<2x32xf32>
    %cst_59 = arith.constant 1.000000e+00 : f32
    %249 = vector.broadcast %cst_59 : f32 to vector<2x32xf32>
    %250 = arith.subf %249, %241 : vector<2x32xf32>
    %251 = arith.mulf %250, %248 : vector<2x32xf32>
    %252 = arith.mulf %241, %217 : vector<2x32xf32>
    %253 = arith.addf %251, %252 : vector<2x32xf32>
    %254 = arith.index_cast %c6_i32 : i32 to index
    %c0_60 = arith.constant 0 : index
    %c0_61 = arith.constant 0 : index
    %255 = vector.load %arg5[%254, %c0_60, %c0_61] : memref<8x2x32xf32, #tpu.memory_space<vmem>>, vector<1x2x32xf32>
    %256 = vector.shape_cast %255 : vector<1x2x32xf32> to vector<2x32xf32>
    %257 = vector.shape_cast %253 : vector<2x32xf32> to vector<1x2x32xf32>
    tpu.vector_store %arg5[%254, %c0_60, %c0_61], %257 {strides = array<i32>} : memref<8x2x32xf32, #tpu.memory_space<vmem>>, vector<1x2x32xf32>,
    %c7_i32 = arith.constant 7 : i32
    %258 = arith.index_cast %c7_i32 : i32 to index
    %c0_62 = arith.constant 0 : index
    %c0_63 = arith.constant 0 : index
    %259 = vector.load %arg2[%258, %c0_62, %c0_63] : memref<8x2x96xf32, #tpu.memory_space<vmem>>, vector<1x2x96xf32>
    %260 = vector.shape_cast %259 : vector<1x2x96xf32> to vector<2x96xf32>
    %cst_64 = arith.constant dense<0.000000e+00> : vector<2x96xf32>
    %261 = tpu.matmul %253, %3, %cst_64 {dimension_numbers = #tpu.dot_dimension_numbers<[1], [0], [0], [1], [0, 0, 1, 1], [], []>} : vector<2x32xf32>, vector<32x96xf32>, vector<2x96xf32> -> vector<2x96xf32>
    %262 = vector.extract_strided_slice %260 {offsets = [0, 0], sizes = [2, 32], strides = [1, 1]} : vector<2x96xf32> to vector<2x32xf32>
    %263 = vector.extract_strided_slice %261 {offsets = [0, 0], sizes = [2, 32], strides = [1, 1]} : vector<2x96xf32> to vector<2x32xf32>
    %264 = arith.addf %262, %263 : vector<2x32xf32>
    %265 = arith.negf %264 : vector<2x32xf32>
    %266 = math.exp %265 : vector<2x32xf32>
    %cst_65 = arith.constant 1.000000e+00 : f32
    %267 = vector.broadcast %cst_65 : f32 to vector<2x32xf32>
    %268 = arith.addf %267, %266 : vector<2x32xf32>
    %269 = arith.divf %267, %268 : vector<2x32xf32>
    %270 = vector.extract_strided_slice %260 {offsets = [0, 32], sizes = [2, 32], strides = [1, 1]} : vector<2x96xf32> to vector<2x32xf32>
    %271 = vector.extract_strided_slice %261 {offsets = [0, 32], sizes = [2, 32], strides = [1, 1]} : vector<2x96xf32> to vector<2x32xf32>
    %272 = arith.addf %270, %271 : vector<2x32xf32>
    %273 = arith.negf %272 : vector<2x32xf32>
    %274 = math.exp %273 : vector<2x32xf32>
    %cst_66 = arith.constant 1.000000e+00 : f32
    %275 = vector.broadcast %cst_66 : f32 to vector<2x32xf32>
    %276 = arith.addf %275, %274 : vector<2x32xf32>
    %277 = arith.divf %275, %276 : vector<2x32xf32>
    %278 = vector.extract_strided_slice %260 {offsets = [0, 64], sizes = [2, 32], strides = [1, 1]} : vector<2x96xf32> to vector<2x32xf32>
    %279 = vector.extract_strided_slice %261 {offsets = [0, 64], sizes = [2, 32], strides = [1, 1]} : vector<2x96xf32> to vector<2x32xf32>
    %280 = vector.broadcast %4 : vector<1x32xf32> to vector<2x32xf32>
    %281 = arith.addf %279, %280 : vector<2x32xf32>
    %282 = arith.mulf %269, %281 : vector<2x32xf32>
    %283 = arith.addf %278, %282 : vector<2x32xf32>
    %284 = math.tanh %283 : vector<2x32xf32>
    %cst_67 = arith.constant 1.000000e+00 : f32
    %285 = vector.broadcast %cst_67 : f32 to vector<2x32xf32>
    %286 = arith.subf %285, %277 : vector<2x32xf32>
    %287 = arith.mulf %286, %284 : vector<2x32xf32>
    %288 = arith.mulf %277, %253 : vector<2x32xf32>
    %289 = arith.addf %287, %288 : vector<2x32xf32>
    %290 = arith.index_cast %c7_i32 : i32 to index
    %c0_68 = arith.constant 0 : index
    %c0_69 = arith.constant 0 : index
    %291 = vector.load %arg5[%290, %c0_68, %c0_69] : memref<8x2x32xf32, #tpu.memory_space<vmem>>, vector<1x2x32xf32>
    %292 = vector.shape_cast %291 : vector<1x2x32xf32> to vector<2x32xf32>
    %293 = vector.shape_cast %289 : vector<2x32xf32> to vector<1x2x32xf32>
    tpu.vector_store %arg5[%290, %c0_68, %c0_69], %293 {strides = array<i32>} : memref<8x2x32xf32, #tpu.memory_space<vmem>>, vector<1x2x32xf32>,
    %c8_i32 = arith.constant 8 : i32
    %c0_70 = arith.constant 0 : index
    %c0_71 = arith.constant 0 : index
    %294 = vector.load %arg6[%c0_70, %c0_71] : memref<2x32xf32, #tpu.memory_space<vmem>>, vector<2x32xf32>
    tpu.vector_store %arg6[%c0_70, %c0_71], %289 {strides = array<i32>} : memref<2x32xf32, #tpu.memory_space<vmem>>, vector<2x32xf32>,
    return
  }
  func.func @transform_0(%arg0: i32, %arg1: i32) -> (i32, i32, i32) {
    %c0_i32 = arith.constant 0 : i32
    %c0_i32_0 = arith.constant 0 : i32
    return %arg1, %arg0, %c0_i32 : i32, i32, i32
  }
  func.func @transform_1(%arg0: i32, %arg1: i32) -> (i32, i32) {
    %c0_i32 = arith.constant 0 : i32
    %c0_i32_0 = arith.constant 0 : i32
    %c0_i32_1 = arith.constant 0 : i32
    return %c0_i32, %c0_i32_0 : i32, i32
  }
  func.func @transform_2(%arg0: i32, %arg1: i32) -> (i32, i32) {
    %c0_i32 = arith.constant 0 : i32
    %c0_i32_0 = arith.constant 0 : i32
    %c0_i32_1 = arith.constant 0 : i32
    return %c0_i32, %c0_i32_0 : i32, i32
  }
  func.func @transform_3(%arg0: i32, %arg1: i32) -> (i32, i32, i32) {
    %c0_i32 = arith.constant 0 : i32
    %c0_i32_0 = arith.constant 0 : i32
    return %arg1, %arg0, %c0_i32 : i32, i32, i32
  }
}

</mosaic_0001>

<llo_original>
// kernel: gru_deep_forward.1
$region0: #{gru_deep_forward.1}
  #allocation0 [shape = 'u32[]', space=smem, size = 0x4, offset = 0x4, fixed_abs, tag = 'smem constant byte address 0x4 - core index']
  #allocation1 [shape = 'u32[72,128]{1,0:T(1,128)}', space=vmem, size = 0x9000, scoped, tag = 'internal scratch']
  #allocation2 [shape = 'f32[2,32]{1,0:T(2,128)}', space=vmem, size = 0x400, scoped, tag = 'scratch operand']
  %s0 = inlined_call_operand.vmem [shape: f32[8,2,96], index: 0, kind: input, shape index: {}]
  %s1 = inlined_call_operand.vmem [shape: f32[32,96], index: 1, kind: input, shape index: {}]
  %s2 = inlined_call_operand.vmem [shape: f32[1,32], index: 2, kind: input, shape index: {}]
  %s3 = inlined_call_operand.vmem [shape: f32[8,2,32], index: 3, kind: output, shape index: {}]
  %s4 = sld [smem:[#allocation0]]
  $region26: #{gru_deep_forward.1} parent=0
    _
  %s6 = ssub.s32 1, %s4
  %s7 = scalar_select 0, %s6, %s4
  // Predicated region
  $region2: #{gru_deep_forward.1} parent=0 // pred_check
    _
  $region3: #{gru_deep_forward.1} parent=0 // pred_check_branch
    %9 = sbr.rel (0) target = $region5
  $region4: #{gru_deep_forward.1} parent=0 // pred_region
    _
  $region5: #{gru_deep_forward.1} parent=0 // pred_fallthru
    _
  // Predicated region
  $region6: #{gru_deep_forward.1} parent=0 // pred_check
    _
  $region7: #{gru_deep_forward.1} parent=0 // pred_check_branch
    %11 = sbr.rel (0) target = $region9
  $region8: #{gru_deep_forward.1} parent=0 // pred_region
    _
  $region9: #{gru_deep_forward.1} parent=0 // pred_fallthru
    _
  // Predicated region
  $region10: #{gru_deep_forward.1} parent=0 // pred_check
    _
  $region11: #{gru_deep_forward.1} parent=0 // pred_check_branch
    %13 = sbr.rel (0) target = $region13
  $region12: #{gru_deep_forward.1} parent=0 // pred_region
    _
  $region13: #{gru_deep_forward.1} parent=0 // pred_fallthru
    _
  %p14 = scmp.eq.s32.totalorder 0, 0
  // Predicated region
  $region14: #{gru_deep_forward.1} parent=0 // pred_check
    %p15 = pneg %p14
  $region15: #{gru_deep_forward.1} parent=0 // pred_check_branch
    %17 = sbr.rel (%p15) target = $region17
  $region16: #{gru_deep_forward.1} parent=0 // pred_region
    %vm18 = vcmask 254976
    %19 = vst.msk [vmem:[#allocation2] sm:$0x3] %vm18, 0.0
  $region17: #{gru_deep_forward.1} parent=0 // pred_fallthru
    _
  %v20 = vld [vmem:[%s1] sm:$0xff]
  %v21 = vld [vmem:[%s1 + $0x8] sm:$0xff]
  %v22 = vld [vmem:[%s1 + $0x10] sm:$0xff]
  %v23 = vld [vmem:[%s1 + $0x18] sm:$0xff]
  %v24 = vld [vmem:[%s2] sm:$0x1]
  %v25 = vld [vmem:[#allocation2] sm:$0x3]
  %v26 = vld [vmem:[%s0] sm:$0x3]
  %vm27 = vcmask 261120
  %v29 = vsel %vm27, %v25, 0
  %31 = vmatpush.msra.mxu0 0.0
  %32 = vmatpush.msra.mxu0 0.0
  %33 = vmatpush.msra.mxu0 0.0
  %34 = vmatpush.msra.mxu0 0.0
  %35 = vmatpush.msra.mxu0 0.0
  %36 = vmatpush.msra.mxu0 0.0
  %37 = vmatpush.msra.mxu0 0.0
  %38 = vmatpush.msra.mxu0 0.0
  %39 = vmatpush.msra.mxu0 0.0
  %40 = vmatpush.msra.mxu0 0.0
  %41 = vmatpush.msra.mxu0 0.0
  %42 = vmatpush.msra.mxu0 0.0
  %43 = vmatpush.msra.mxu0 %v23
  %44 = vmatpush.msra.mxu0 %v22
  %45 = vmatpush.msra.mxu0 %v21
  %46 = vmatpush.msra.mxu0 %v20
  %47 = vmatmul.f32.gmra.mxu0 %v29
  %v48 = vpop.f32.mrf.mxu0
  %v49 = vadd.f32 0.0, %v48
  %50 = vdwg.mxu0
  %v51 = vadd.f32 %v26, %v49
  %v52 = vxor.u32 %v51, 2147483648
  %v53 = vmul.f32 %v52, 1.442695
  %v54 = vpow.pop %v53
  %v55 = vadd.f32 %v54, 1.0
  %v56 = vrcp.pop %v55
  %v57 = vmul.f32 %v55, %v56
  %v58 = vsub.f32 1.0, %v57
  %v59 = vmul.f32 %v56, %v58
  %v60 = vadd.f32 %v56, %v59
  %vm61 = vweird.f32 %v55
  %vm62 = vweird.f32 %v56
  %vm63 = vmor %vm61, %vm62
  %v64 = vsel %vm63, %v56, %v60
  %v65 = vand.u32 2147483647, %v55
  %vm66 = vcmp.eq.f32.partialorder %v65, 8.507059e+37
  %v67 = vand.u32 %v55, 2147483648
  %v68 = vor.u32 1.1754944e-38, %v67
  %v69 = vsel %vm66, %v68, %v64
  %v70 = vmul.f32 1.0, %v69
  %v72 = vperm.slane %v24, 0
  %73 = vrot.lane.b32.xlu0 %v72, 64
  %v74 = vpop.permute.xlu0 %73
  %v76 = vadd.f32 %v49, %v74
  %78 = vrot.lane.b32.xlu0 %v76, 64
  %v79 = vpop.permute.xlu0 %78
  %v81 = vmul.f32 %v70, %v79
  %83 = vrot.lane.b32.xlu0 %v81, 64
  %v84 = vpop.permute.xlu0 %83
  %v86 = vadd.f32 %v26, %v84
  %v87 = vtanh.pop %v86
  %v88 = vsub.f32 1.0, %v70
  %90 = vrot.lane.b32.xlu0 %v87, 96
  %v91 = vpop.permute.xlu0 %90
  %v93 = vmul.f32 %v88, %v91
  %94 = vrot.lane.b32.xlu0 %v25, 32
  %v95 = vpop.permute.xlu0 %94
  %v97 = vmul.f32 %v70, %v95
  %v98 = vadd.f32 %v93, %v97
  %100 = vrot.lane.b32.xlu0 %v98, 96
  %v101 = vpop.permute.xlu0 %100
  %vm103 = vcmask 254976
  %104 = vst.msk [vmem:[%s3] sm:$0x3] %vm103, %v101
  %s105 = scalar_lea.vmem %s0, 2
  %v106 = vld [vmem:[%s105] sm:$0x3]
  %v107 = vsel %vm27, %v101, 0
  %109 = vmatpush.msra.mxu0 0.0
  %110 = vmatpush.msra.mxu0 0.0
  %111 = vmatpush.msra.mxu0 0.0
  %112 = vmatpush.msra.mxu0 0.0
  %113 = vmatpush.msra.mxu0 0.0
  %114 = vmatpush.msra.mxu0 0.0
  %115 = vmatpush.msra.mxu0 0.0
  %116 = vmatpush.msra.mxu0 0.0
  %117 = vmatpush.msra.mxu0 0.0
  %118 = vmatpush.msra.mxu0 0.0
  %119 = vmatpush.msra.mxu0 0.0
  %120 = vmatpush.msra.mxu0 0.0
  %121 = vmatpush.msra.mxu0 %v23
  %122 = vmatpush.msra.mxu0 %v22
  %123 = vmatpush.msra.mxu0 %v21
  %124 = vmatpush.msra.mxu0 %v20
  %125 = vmatmul.f32.gmra.mxu0 %v107
  %v126 = vpop.f32.mrf.mxu0
  %v127 = vadd.f32 0.0, %v126
  %128 = vdwg.mxu0
  %v129 = vadd.f32 %v106, %v127
  %v130 = vxor.u32 %v129, 2147483648
  %v131 = vmul.f32 %v130, 1.442695
  %v132 = vpow.pop %v131
  %v133 = vadd.f32 %v132, 1.0
  %v134 = vrcp.pop %v133
  %v135 = vmul.f32 %v133, %v134
  %v136 = vsub.f32 1.0, %v135
  %v137 = vmul.f32 %v134, %v136
  %v138 = vadd.f32 %v134, %v137
  %vm139 = vweird.f32 %v133
  %vm140 = vweird.f32 %v134
  %vm141 = vmor %vm139, %vm140
  %v142 = vsel %vm141, %v134, %v138
  %v143 = vand.u32 2147483647, %v133
  %vm144 = vcmp.eq.f32.partialorder %v143, 8.507059e+37
  %v145 = vand.u32 %v133, 2147483648
  %v146 = vor.u32 1.1754944e-38, %v145
  %v147 = vsel %vm144, %v146, %v142
  %v148 = vmul.f32 1.0, %v147
  %v149 = vadd.f32 %v127, %v74
  %151 = vrot.lane.b32.xlu0 %v149, 64
  %v152 = vpop.permute.xlu0 %151
  %v154 = vmul.f32 %v148, %v152
  %156 = vrot.lane.b32.xlu0 %v154, 64
  %v157 = vpop.permute.xlu0 %156
  %v159 = vadd.f32 %v106, %v157
  %v160 = vtanh.pop %v159
  %v161 = vsub.f32 1.0, %v148
  %163 = vrot.lane.b32.xlu0 %v160, 96
  %v164 = vpop.permute.xlu0 %163
  %v166 = vmul.f32 %v161, %v164
  %v167 = vmul.f32 %v148, %v98
  %v168 = vadd.f32 %v166, %v167
  %170 = vrot.lane.b32.xlu0 %v168, 96
  %v171 = vpop.permute.xlu0 %170
  %s173 = scalar_lea.vmem %s3, 2
  %174 = vst.msk [vmem:[%s173] sm:$0x3] %vm103, %v171
  %s175 = scalar_lea.vmem %s0, 4
  %v176 = vld [vmem:[%s175] sm:$0x3]
  %v177 = vsel %vm27, %v171, 0
  %179 = vmatpush.msra.mxu0 0.0
  %180 = vmatpush.msra.mxu0 0.0
  %181 = vmatpush.msra.mxu0 0.0
  %182 = vmatpush.msra.mxu0 0.0
  %183 = vmatpush.msra.mxu0 0.0
  %184 = vmatpush.msra.mxu0 0.0
  %185 = vmatpush.msra.mxu0 0.0
  %186 = vmatpush.msra.mxu0 0.0
  %187 = vmatpush.msra.mxu0 0.0
  %188 = vmatpush.msra.mxu0 0.0
  %189 = vmatpush.msra.mxu0 0.0
  %190 = vmatpush.msra.mxu0 0.0
  %191 = vmatpush.msra.mxu0 %v23
  %192 = vmatpush.msra.mxu0 %v22
  %193 = vmatpush.msra.mxu0 %v21
  %194 = vmatpush.msra.mxu0 %v20
  %195 = vmatmul.f32.gmra.mxu0 %v177
  %v196 = vpop.f32.mrf.mxu0
  %v197 = vadd.f32 0.0, %v196
  %198 = vdwg.mxu0
  %v199 = vadd.f32 %v176, %v197
  %v200 = vxor.u32 %v199, 2147483648
  %v201 = vmul.f32 %v200, 1.442695
  %v202 = vpow.pop %v201
  %v203 = vadd.f32 %v202, 1.0
  %v204 = vrcp.pop %v203
  %v205 = vmul.f32 %v203, %v204
  %v206 = vsub.f32 1.0, %v205
  %v207 = vmul.f32 %v204, %v206
  %v208 = vadd.f32 %v204, %v207
  %vm209 = vweird.f32 %v203
  %vm210 = vweird.f32 %v204
  %vm211 = vmor %vm209, %vm210
  %v212 = vsel %vm211, %v204, %v208
  %v213 = vand.u32 2147483647, %v203
  %vm214 = vcmp.eq.f32.partialorder %v213, 8.507059e+37
  %v215 = vand.u32 %v203, 2147483648
  %v216 = vor.u32 1.1754944e-38, %v215
  %v217 = vsel %vm214, %v216, %v212
  %v218 = vmul.f32 1.0, %v217
  %v219 = vadd.f32 %v197, %v74
  %221 = vrot.lane.b32.xlu0 %v219, 64
  %v222 = vpop.permute.xlu0 %221
  %v224 = vmul.f32 %v218, %v222
  %226 = vrot.lane.b32.xlu0 %v224, 64
  %v227 = vpop.permute.xlu0 %226
  %v229 = vadd.f32 %v176, %v227
  %v230 = vtanh.pop %v229
  %v231 = vsub.f32 1.0, %v218
  %233 = vrot.lane.b32.xlu0 %v230, 96
  %v234 = vpop.permute.xlu0 %233
  %v236 = vmul.f32 %v231, %v234
  %v237 = vmul.f32 %v218, %v168
  %v238 = vadd.f32 %v236, %v237
  %240 = vrot.lane.b32.xlu0 %v238, 96
  %v241 = vpop.permute.xlu0 %240
  %s243 = scalar_lea.vmem %s3, 4
  %244 = vst.msk [vmem:[%s243] sm:$0x3] %vm103, %v241
  %s245 = scalar_lea.vmem %s0, 6
  %v246 = vld [vmem:[%s245] sm:$0x3]
  %v247 = vsel %vm27, %v241, 0
  %249 = vmatpush.msra.mxu0 0.0
  %250 = vmatpush.msra.mxu0 0.0
  %251 = vmatpush.msra.mxu0 0.0
  %252 = vmatpush.msra.mxu0 0.0
  %253 = vmatpush.msra.mxu0 0.0
  %254 = vmatpush.msra.mxu0 0.0
  %255 = vmatpush.msra.mxu0 0.0
  %256 = vmatpush.msra.mxu0 0.0
  %257 = vmatpush.msra.mxu0 0.0
  %258 = vmatpush.msra.mxu0 0.0
  %259 = vmatpush.msra.mxu0 0.0
  %260 = vmatpush.msra.mxu0 0.0
  %261 = vmatpush.msra.mxu0 %v23
  %262 = vmatpush.msra.mxu0 %v22
  %263 = vmatpush.msra.mxu0 %v21
  %264 = vmatpush.msra.mxu0 %v20
  %265 = vmatmul.f32.gmra.mxu0 %v247
  %v266 = vpop.f32.mrf.mxu0
  %v267 = vadd.f32 0.0, %v266
  %268 = vdwg.mxu0
  %v269 = vadd.f32 %v246, %v267
  %v270 = vxor.u32 %v269, 2147483648
  %v271 = vmul.f32 %v270, 1.442695
  %v272 = vpow.pop %v271
  %v273 = vadd.f32 %v272, 1.0
  %v274 = vrcp.pop %v273
  %v275 = vmul.f32 %v273, %v274
  %v276 = vsub.f32 1.0, %v275
  %v277 = vmul.f32 %v274, %v276
  %v278 = vadd.f32 %v274, %v277
  %vm279 = vweird.f32 %v273
  %vm280 = vweird.f32 %v274
  %vm281 = vmor %vm279, %vm280
  %v282 = vsel %vm281, %v274, %v278
  %v283 = vand.u32 2147483647, %v273
  %vm284 = vcmp.eq.f32.partialorder %v283, 8.507059e+37
  %v285 = vand.u32 %v273, 2147483648
  %v286 = vor.u32 1.1754944e-38, %v285
  %v287 = vsel %vm284, %v286, %v282
  %v288 = vmul.f32 1.0, %v287
  %v289 = vadd.f32 %v267, %v74
  %291 = vrot.lane.b32.xlu0 %v289, 64
  %v292 = vpop.permute.xlu0 %291
  %v294 = vmul.f32 %v288, %v292
  %296 = vrot.lane.b32.xlu0 %v294, 64
  %v297 = vpop.permute.xlu0 %296
  %v299 = vadd.f32 %v246, %v297
  %v300 = vtanh.pop %v299
  %v301 = vsub.f32 1.0, %v288
  %303 = vrot.lane.b32.xlu0 %v300, 96
  %v304 = vpop.permute.xlu0 %303
  %v306 = vmul.f32 %v301, %v304
  %v307 = vmul.f32 %v288, %v238
  %v308 = vadd.f32 %v306, %v307
  %310 = vrot.lane.b32.xlu0 %v308, 96
  %v311 = vpop.permute.xlu0 %310
  %s313 = scalar_lea.vmem %s3, 6
  %314 = vst.msk [vmem:[%s313] sm:$0x3] %vm103, %v311
  %s315 = scalar_lea.vmem %s0, 8
  %v316 = vld [vmem:[%s315] sm:$0x3]
  %v317 = vsel %vm27, %v311, 0
  %319 = vmatpush.msra.mxu0 0.0
  %320 = vmatpush.msra.mxu0 0.0
  %321 = vmatpush.msra.mxu0 0.0
  %322 = vmatpush.msra.mxu0 0.0
  %323 = vmatpush.msra.mxu0 0.0
  %324 = vmatpush.msra.mxu0 0.0
  %325 = vmatpush.msra.mxu0 0.0
  %326 = vmatpush.msra.mxu0 0.0
  %327 = vmatpush.msra.mxu0 0.0
  %328 = vmatpush.msra.mxu0 0.0
  %329 = vmatpush.msra.mxu0 0.0
  %330 = vmatpush.msra.mxu0 0.0
  %331 = vmatpush.msra.mxu0 %v23
  %332 = vmatpush.msra.mxu0 %v22
  %333 = vmatpush.msra.mxu0 %v21
  %334 = vmatpush.msra.mxu0 %v20
  %335 = vmatmul.f32.gmra.mxu0 %v317
  %v336 = vpop.f32.mrf.mxu0
  %v337 = vadd.f32 0.0, %v336
  %338 = vdwg.mxu0
  %v339 = vadd.f32 %v316, %v337
  %v340 = vxor.u32 %v339, 2147483648
  %v341 = vmul.f32 %v340, 1.442695
  %v342 = vpow.pop %v341
  %v343 = vadd.f32 %v342, 1.0
  %v344 = vrcp.pop %v343
  %v345 = vmul.f32 %v343, %v344
  %v346 = vsub.f32 1.0, %v345
  %v347 = vmul.f32 %v344, %v346
  %v348 = vadd.f32 %v344, %v347
  %vm349 = vweird.f32 %v343
  %vm350 = vweird.f32 %v344
  %vm351 = vmor %vm349, %vm350
  %v352 = vsel %vm351, %v344, %v348
  %v353 = vand.u32 2147483647, %v343
  %vm354 = vcmp.eq.f32.partialorder %v353, 8.507059e+37
  %v355 = vand.u32 %v343, 2147483648
  %v356 = vor.u32 1.1754944e-38, %v355
  %v357 = vsel %vm354, %v356, %v352
  %v358 = vmul.f32 1.0, %v357
  %v359 = vadd.f32 %v337, %v74
  %361 = vrot.lane.b32.xlu0 %v359, 64
  %v362 = vpop.permute.xlu0 %361
  %v364 = vmul.f32 %v358, %v362
  %366 = vrot.lane.b32.xlu0 %v364, 64
  %v367 = vpop.permute.xlu0 %366
  %v369 = vadd.f32 %v316, %v367
  %v370 = vtanh.pop %v369
  %v371 = vsub.f32 1.0, %v358
  %373 = vrot.lane.b32.xlu0 %v370, 96
  %v374 = vpop.permute.xlu0 %373
  %v376 = vmul.f32 %v371, %v374
  %v377 = vmul.f32 %v358, %v308
  %v378 = vadd.f32 %v376, %v377
  %380 = vrot.lane.b32.xlu0 %v378, 96
  %v381 = vpop.permute.xlu0 %380
  %s383 = scalar_lea.vmem %s3, 8
  %384 = vst.msk [vmem:[%s383] sm:$0x3] %vm103, %v381
  %s385 = scalar_lea.vmem %s0, 10
  %v386 = vld [vmem:[%s385] sm:$0x3]
  %v387 = vsel %vm27, %v381, 0
  %389 = vmatpush.msra.mxu0 0.0
  %390 = vmatpush.msra.mxu0 0.0
  %391 = vmatpush.msra.mxu0 0.0
  %392 = vmatpush.msra.mxu0 0.0
  %393 = vmatpush.msra.mxu0 0.0
  %394 = vmatpush.msra.mxu0 0.0
  %395 = vmatpush.msra.mxu0 0.0
  %396 = vmatpush.msra.mxu0 0.0
  %397 = vmatpush.msra.mxu0 0.0
  %398 = vmatpush.msra.mxu0 0.0
  %399 = vmatpush.msra.mxu0 0.0
  %400 = vmatpush.msra.mxu0 0.0
  %401 = vmatpush.msra.mxu0 %v23
  %402 = vmatpush.msra.mxu0 %v22
  %403 = vmatpush.msra.mxu0 %v21
  %404 = vmatpush.msra.mxu0 %v20
  %405 = vmatmul.f32.gmra.mxu0 %v387
  %v406 = vpop.f32.mrf.mxu0
  %v407 = vadd.f32 0.0, %v406
  %408 = vdwg.mxu0
  %v409 = vadd.f32 %v386, %v407
  %v410 = vxor.u32 %v409, 2147483648
  %v411 = vmul.f32 %v410, 1.442695
  %v412 = vpow.pop %v411
  %v413 = vadd.f32 %v412, 1.0
  %v414 = vrcp.pop %v413
  %v415 = vmul.f32 %v413, %v414
  %v416 = vsub.f32 1.0, %v415
  %v417 = vmul.f32 %v414, %v416
  %v418 = vadd.f32 %v414, %v417
  %vm419 = vweird.f32 %v413
  %vm420 = vweird.f32 %v414
  %vm421 = vmor %vm419, %vm420
  %v422 = vsel %vm421, %v414, %v418
  %v423 = vand.u32 2147483647, %v413
  %vm424 = vcmp.eq.f32.partialorder %v423, 8.507059e+37
  %v425 = vand.u32 %v413, 2147483648
  %v426 = vor.u32 1.1754944e-38, %v425
  %v427 = vsel %vm424, %v426, %v422
  %v428 = vmul.f32 1.0, %v427
  %v429 = vadd.f32 %v407, %v74
  %431 = vrot.lane.b32.xlu0 %v429, 64
  %v432 = vpop.permute.xlu0 %431
  %v434 = vmul.f32 %v428, %v432
  %436 = vrot.lane.b32.xlu0 %v434, 64
  %v437 = vpop.permute.xlu0 %436
  %v439 = vadd.f32 %v386, %v437
  %v440 = vtanh.pop %v439
  %v441 = vsub.f32 1.0, %v428
  %443 = vrot.lane.b32.xlu0 %v440, 96
  %v444 = vpop.permute.xlu0 %443
  %v446 = vmul.f32 %v441, %v444
  %v447 = vmul.f32 %v428, %v378
  %v448 = vadd.f32 %v446, %v447
  %450 = vrot.lane.b32.xlu0 %v448, 96
  %v451 = vpop.permute.xlu0 %450
  %s453 = scalar_lea.vmem %s3, 10
  %454 = vst.msk [vmem:[%s453] sm:$0x3] %vm103, %v451
  %s455 = scalar_lea.vmem %s0, 12
  %v456 = vld [vmem:[%s455] sm:$0x3]
  %v457 = vsel %vm27, %v451, 0
  %459 = vmatpush.msra.mxu0 0.0
  %460 = vmatpush.msra.mxu0 0.0
  %461 = vmatpush.msra.mxu0 0.0
  %462 = vmatpush.msra.mxu0 0.0
  %463 = vmatpush.msra.mxu0 0.0
  %464 = vmatpush.msra.mxu0 0.0
  %465 = vmatpush.msra.mxu0 0.0
  %466 = vmatpush.msra.mxu0 0.0
  %467 = vmatpush.msra.mxu0 0.0
  %468 = vmatpush.msra.mxu0 0.0
  %469 = vmatpush.msra.mxu0 0.0
  %470 = vmatpush.msra.mxu0 0.0
  %471 = vmatpush.msra.mxu0 %v23
  %472 = vmatpush.msra.mxu0 %v22
  %473 = vmatpush.msra.mxu0 %v21
  %474 = vmatpush.msra.mxu0 %v20
  %475 = vmatmul.f32.gmra.mxu0 %v457
  %v476 = vpop.f32.mrf.mxu0
  %v477 = vadd.f32 0.0, %v476
  %478 = vdwg.mxu0
  %v479 = vadd.f32 %v456, %v477
  %v480 = vxor.u32 %v479, 2147483648
  %v481 = vmul.f32 %v480, 1.442695
  %v482 = vpow.pop %v481
  %v483 = vadd.f32 %v482, 1.0
  %v484 = vrcp.pop %v483
  %v485 = vmul.f32 %v483, %v484
  %v486 = vsub.f32 1.0, %v485
  %v487 = vmul.f32 %v484, %v486
  %v488 = vadd.f32 %v484, %v487
  %vm489 = vweird.f32 %v483
  %vm490 = vweird.f32 %v484
  %vm491 = vmor %vm489, %vm490
  %v492 = vsel %vm491, %v484, %v488
  %v493 = vand.u32 2147483647, %v483
  %vm494 = vcmp.eq.f32.partialorder %v493, 8.507059e+37
  %v495 = vand.u32 %v483, 2147483648
  %v496 = vor.u32 1.1754944e-38, %v495
  %v497 = vsel %vm494, %v496, %v492
  %v498 = vmul.f32 1.0, %v497
  %v499 = vadd.f32 %v477, %v74
  %501 = vrot.lane.b32.xlu0 %v499, 64
  %v502 = vpop.permute.xlu0 %501
  %v504 = vmul.f32 %v498, %v502
  %506 = vrot.lane.b32.xlu0 %v504, 64
  %v507 = vpop.permute.xlu0 %506
  %v509 = vadd.f32 %v456, %v507
  %v510 = vtanh.pop %v509
  %v511 = vsub.f32 1.0, %v498
  %513 = vrot.lane.b32.xlu0 %v510, 96
  %v514 = vpop.permute.xlu0 %513
  %v516 = vmul.f32 %v511, %v514
  %v517 = vmul.f32 %v498, %v448
  %v518 = vadd.f32 %v516, %v517
  %520 = vrot.lane.b32.xlu0 %v518, 96
  %v521 = vpop.permute.xlu0 %520
  %s523 = scalar_lea.vmem %s3, 12
  %524 = vst.msk [vmem:[%s523] sm:$0x3] %vm103, %v521
  %s525 = scalar_lea.vmem %s0, 14
  %v526 = vld [vmem:[%s525] sm:$0x3]
  %v527 = vsel %vm27, %v521, 0
  %529 = vmatpush.msra.mxu0 0.0
  %530 = vmatpush.msra.mxu0 0.0
  %531 = vmatpush.msra.mxu0 0.0
  %532 = vmatpush.msra.mxu0 0.0
  %533 = vmatpush.msra.mxu0 0.0
  %534 = vmatpush.msra.mxu0 0.0
  %535 = vmatpush.msra.mxu0 0.0
  %536 = vmatpush.msra.mxu0 0.0
  %537 = vmatpush.msra.mxu0 0.0
  %538 = vmatpush.msra.mxu0 0.0
  %539 = vmatpush.msra.mxu0 0.0
  %540 = vmatpush.msra.mxu0 0.0
  %541 = vmatpush.msra.mxu0 %v23
  %542 = vmatpush.msra.mxu0 %v22
  %543 = vmatpush.msra.mxu0 %v21
  %544 = vmatpush.msra.mxu0 %v20
  %545 = vmatmul.f32.gmra.mxu0 %v527
  %v546 = vpop.f32.mrf.mxu0
  %v547 = vadd.f32 0.0, %v546
  %548 = vdwg.mxu0
  %v549 = vadd.f32 %v526, %v547
  %v550 = vxor.u32 %v549, 2147483648
  %v551 = vmul.f32 %v550, 1.442695
  %v552 = vpow.pop %v551
  %v553 = vadd.f32 %v552, 1.0
  %v554 = vrcp.pop %v553
  %v555 = vmul.f32 %v553, %v554
  %v556 = vsub.f32 1.0, %v555
  %v557 = vmul.f32 %v554, %v556
  %v558 = vadd.f32 %v554, %v557
  %vm559 = vweird.f32 %v553
  %vm560 = vweird.f32 %v554
  %vm561 = vmor %vm559, %vm560
  %v562 = vsel %vm561, %v554, %v558
  %v563 = vand.u32 2147483647, %v553
  %vm564 = vcmp.eq.f32.partialorder %v563, 8.507059e+37
  %v565 = vand.u32 %v553, 2147483648
  %v566 = vor.u32 1.1754944e-38, %v565
  %v567 = vsel %vm564, %v566, %v562
  %v568 = vmul.f32 1.0, %v567
  %v569 = vadd.f32 %v547, %v74
  %571 = vrot.lane.b32.xlu0 %v569, 64
  %v572 = vpop.permute.xlu0 %571
  %v574 = vmul.f32 %v568, %v572
  %576 = vrot.lane.b32.xlu0 %v574, 64
  %v577 = vpop.permute.xlu0 %576
  %v579 = vadd.f32 %v526, %v577
  %v580 = vtanh.pop %v579
  %v581 = vsub.f32 1.0, %v568
  %583 = vrot.lane.b32.xlu0 %v580, 96
  %v584 = vpop.permute.xlu0 %583
  %v586 = vmul.f32 %v581, %v584
  %v587 = vmul.f32 %v568, %v518
  %v588 = vadd.f32 %v586, %v587
  %590 = vrot.lane.b32.xlu0 %v588, 96
  %v591 = vpop.permute.xlu0 %590
  %s593 = scalar_lea.vmem %s3, 14
  %594 = vst.msk [vmem:[%s593] sm:$0x3] %vm103, %v591
  %595 = vst.msk [vmem:[#allocation2] sm:$0x3] %vm103, %v591
  // Predicated region
  $region18: #{gru_deep_forward.1} parent=0 // pred_check
    _
  $region19: #{gru_deep_forward.1} parent=0 // pred_check_branch
    %597 = sbr.rel (0) target = $region21
  $region20: #{gru_deep_forward.1} parent=0 // pred_region
    _
  $region21: #{gru_deep_forward.1} parent=0 // pred_fallthru
    _
  // Predicated region
  $region22: #{gru_deep_forward.1} parent=0 // pred_check
    _
  $region23: #{gru_deep_forward.1} parent=0 // pred_check_branch
    %599 = sbr.rel (0) target = $region25
  $region24: #{gru_deep_forward.1} parent=0 // pred_region
    _
  $region25: #{gru_deep_forward.1} parent=0 // pred_fallthru
    _

</llo_original>
